<compile_context>
chip_gen: v5e
topology: v5e:2x2
jax: 0.10.0
libtpu: 0.0.40
codegen_flags: <defaults>
</compile_context>

<pallas_src>
import math
from functools import partial

import jax
import jax.numpy as jnp
from jax.experimental import pallas as pl
from jax.experimental.pallas import tpu as pltpu

_EPS = 1e-12  # torch.nn.functional.normalize default eps


def _round_up(a, m):
    return ((a + m - 1) // m) * m


def _l2_normalize(v):
    # torch F.normalize: v / max(||v||_2, eps)  ==  v * rsqrt(max(sumsq, eps^2))
    sumsq = jnp.sum(v * v, axis=-1, keepdims=True)
    return v * jax.lax.rsqrt(jnp.maximum(sumsq, _EPS * _EPS))


def _acos_poly(c):
    # Abramowitz & Stegun 4.4.46: acos(x) = sqrt(1-x) * P7(x) on [0, 1],
    # |err| <= 2e-8; extended to [-1, 0) via acos(x) = pi - acos(-x).
    a = jnp.abs(c)
    p = -0.0012624911
    p = p * a + 0.0066700901
    p = p * a - 0.0170881256
    p = p * a + 0.0308918810
    p = p * a - 0.0501743046
    p = p * a + 0.0889789874
    p = p * a - 0.2145988016
    p = p * a + 1.5707963050
    r = jnp.sqrt(jnp.maximum(1.0 - a, 0.0)) * p
    return jnp.where(c < 0.0, math.pi - r, r)


def _sin_0_pi(t):
    # sin(t) for t in [0, pi]: reflect to [0, pi/2], degree-11 odd series.
    x = jnp.minimum(t, math.pi - t)   # sin(t) == sin(pi - t)
    x2 = x * x
    p = -2.5052108e-08
    p = p * x2 + 2.7557319e-06
    p = p * x2 - 1.9841270e-04
    p = p * x2 + 8.3333333e-03
    p = p * x2 - 1.6666667e-01
    return x * (1.0 + x2 * p)


def _slerp_kernel(alpha_ref, x_ref, y_ref, o_ref, *, final_normalize):
    # alpha_ref: (1, 1) (single weight) or (1, D) (per-dim weight); sigmoid is
    #            already applied in the wrapper (parameter transform, done once).
    # x_ref, y_ref, o_ref: (tile_rows, D); I/O stays in native dtype, compute f32.
    x = x_ref[...].astype(jnp.float32)
    y = y_ref[...].astype(jnp.float32)
    alpha = alpha_ref[...].astype(jnp.float32)

    xn = _l2_normalize(x)
    yn = _l2_normalize(y)

    c = jnp.sum(xn * yn, axis=-1, keepdims=True)            # (R, 1) = cos(theta)
    c = jnp.clip(c, -1.0, 1.0)
    theta = _acos_poly(c)                                    # (R, 1)
    # 1 / sin(theta) = rsqrt(1 - cos^2); tiny floor avoids inf for parallel rows.
    inv_sin_theta = jax.lax.rsqrt(jnp.maximum(1.0 - c * c, 1e-30))

    # With a single weight these are (R, 1) (cheap); per-dim weight -> (R, D).
    w_x = _sin_0_pi((1.0 - alpha) * theta)
    w_y = _sin_0_pi(alpha * theta)
    z = (w_x * xn + w_y * yn) * inv_sin_theta

    if final_normalize:                                      # only when not single_weight
        z = _l2_normalize(z)
    o_ref[...] = z.astype(o_ref.dtype)


class HypersphereSLERP:
    """JAX/Pallas port of the PyTorch HypersphereSLERP module (forward only)."""

    def __init__(self, dim, single_weight=True):
        self.dim = dim
        self.single_weight = single_weight
        # Deterministic init, exactly as the PyTorch __init__ (torch.ones).
        self.slerp_weight = jnp.ones((1,) if single_weight else (dim,), jnp.float32)

    def __call__(self, x, y):
        assert x.shape == y.shape and x.shape[-1] == self.dim
        orig_shape = x.shape
        D = self.dim
        x2 = x.reshape(-1, D)
        y2 = y.reshape(-1, D)
        N = x2.shape[0]

        # alpha = sigmoid(weight): folded once in the wrapper, not per grid step.
        alpha = jax.nn.sigmoid(self.slerp_weight.astype(jnp.float32)).reshape(1, -1)

        # --- tile sizing: memory-bound kernel, aim for ~2 MiB blocks ----------
        elem_bytes = jnp.dtype(x.dtype).itemsize
        bytes_per_row = max(D * elem_bytes, 1)
        tile_rows = (2 * 1024 * 1024) // bytes_per_row
        tile_rows = int(max(8, min(4096, tile_rows))) // 8 * 8
        n8 = _round_up(N, 8)
        tile_rows = min(tile_rows, n8)
        # v7x has 2 TensorCores: keep >= 2 steps on the parallel axis if possible.
        if n8 > 8 and _round_up(n8, tile_rows) // tile_rows < 2:
            tile_rows = max(8, _round_up((n8 + 1) // 2, 8))
        n_padded = _round_up(N, tile_rows)
        grid = (n_padded // tile_rows,)

        if n_padded != N:
            pad = n_padded - N
            # Pad with well-conditioned rows; padded outputs are sliced off below.
            x2 = jnp.concatenate([x2, jnp.ones((pad, D), x2.dtype)], axis=0)
            y2 = jnp.concatenate([y2, jnp.ones((pad, D), y2.dtype)], axis=0)

        # Double-buffered I/O (6 blocks) + f32 temporaries; capped at 48 MiB so
        # it stays under v7x's 64 MiB physical VMEM.
        vmem_limit = int(min(48 * 1024 * 1024,
                             max(16 * 1024 * 1024, 16 * tile_rows * D * 4)))

        kernel = partial(_slerp_kernel, final_normalize=not self.single_weight)

        # TODO(synk): for D < 128 (demo uses D=32) pack 128 // D rows per
        # lane-row (segmented reductions) to get lane-dense stores.
        out2 = pl.pallas_call(
            kernel,
            out_shape=jax.ShapeDtypeStruct((n_padded, D), x.dtype),
            grid_spec=pltpu.PrefetchScalarGridSpec(
                num_scalar_prefetch=0,
                grid=grid,
                in_specs=[
                    pl.BlockSpec(alpha.shape, lambda i: (0, 0)),       # alpha
                    pl.BlockSpec((tile_rows, D), lambda i: (i, 0)),    # x rows
                    pl.BlockSpec((tile_rows, D), lambda i: (i, 0)),    # y rows
                ],
                out_specs=pl.BlockSpec((tile_rows, D), lambda i: (i, 0)),
            ),
            compiler_params=pltpu.CompilerParams(
                dimension_semantics=("parallel",),
                vmem_limit_bytes=vmem_limit),
        )(alpha, x2, y2)

        return out2[:N].reshape(orig_shape)


# ----------------------------- pure-JAX reference -----------------------------
def _l2_normalize_ref(v):
    norm = jnp.sqrt(jnp.sum(v * v, axis=-1, keepdims=True))
    return v / jnp.maximum(norm, _EPS)


def _reference(x, y, slerp_weight, single_weight):
    # Mirrors the PyTorch forward exactly.
    xn = _l2_normalize_ref(x)
    yn = _l2_normalize_ref(y)
    cos_theta = jnp.sum(xn * yn, axis=-1, keepdims=True)
    theta = jnp.arccos(cos_theta)
    sin_theta = jnp.sin(theta)
    alpha = jax.nn.sigmoid(slerp_weight)
    out = (jnp.sin((1.0 - alpha) * theta) / sin_theta * xn
           + jnp.sin(alpha * theta) / sin_theta * yn)
    if not single_weight:
        out = _l2_normalize_ref(out)
    return out


if __name__ == "__main__":
    B, S, D = 2, 8, 32
    key = jax.random.PRNGKey(0)
    kx, ky = jax.random.split(key)
    x = jax.random.normal(kx, (B, S, D), jnp.float32)
    y = jax.random.normal(ky, (B, S, D), jnp.float32)

    for single_weight in (True, False):
        mod = HypersphereSLERP(dim=D, single_weight=single_weight)
        out = mod(x, y)
        jax.block_until_ready(out)
        ref = _reference(x, y, mod.slerp_weight, single_weight)
        assert out.shape == (B, S, D)
        err = float(jnp.max(jnp.abs(out - ref)))
        assert err < 2e-5, f"single_weight={single_weight}: max |err| = {err}"

    print("KERNEL_OK")
</pallas_src>

<mosaic_0001>
module attributes {stable_mosaic.version = 11 : i64} {
  func.func @_slerp_kernel(%arg0: i32, %arg1: memref<1x1xf32, #tpu.memory_space<vmem>>, %arg2: memref<8x32xf32, #tpu.memory_space<vmem>>, %arg3: memref<8x32xf32, #tpu.memory_space<vmem>>, %arg4: memref<8x32xf32, #tpu.memory_space<vmem>>) attributes {dimension_semantics = [#tpu.dimension_semantics<parallel>], iteration_bounds = array<i64: 2>, scalar_prefetch = 0 : i64, scratch_operands = 0 : i64, tpu.core_type = #tpu.core_type<tc>, window_params = [{pipeline_mode = #tpu.pipeline_mode<synchronous>, transform_indices = @transform_0, window_bounds = array<i64: 1, 1>}, {transform_indices = @transform_1, window_bounds = array<i64: 8, 32>}, {transform_indices = @transform_2, window_bounds = array<i64: 8, 32>}, {transform_indices = @transform_3, window_bounds = array<i64: 8, 32>}]} {
    %c0 = arith.constant 0 : index
    %c0_0 = arith.constant 0 : index
    %0 = vector.load %arg2[%c0, %c0_0] : memref<8x32xf32, #tpu.memory_space<vmem>>, vector<8x32xf32>
    %c0_1 = arith.constant 0 : index
    %c0_2 = arith.constant 0 : index
    %1 = vector.load %arg3[%c0_1, %c0_2] : memref<8x32xf32, #tpu.memory_space<vmem>>, vector<8x32xf32>
    %c0_3 = arith.constant 0 : index
    %c0_4 = arith.constant 0 : index
    %2 = vector.load %arg1[%c0_3, %c0_4] : memref<1x1xf32, #tpu.memory_space<vmem>>, vector<1x1xf32>
    %3 = arith.mulf %0, %0 : vector<8x32xf32>
    %cst = arith.constant dense<0.000000e+00> : vector<8xf32>
    %4 = vector.multi_reduction <add>, %3, %cst [1] : vector<8x32xf32> to vector<8xf32>
    %5 = vector.shape_cast %4 : vector<8xf32> to vector<8x1xf32>
    %cst_5 = arith.constant 1.000000e-24 : f32
    %6 = vector.broadcast %cst_5 : f32 to vector<8x1xf32>
    %7 = arith.maximumf %5, %6 : vector<8x1xf32>
    %8 = math.rsqrt %7 : vector<8x1xf32>
    %9 = vector.broadcast %8 : vector<8x1xf32> to vector<8x32xf32>
    %10 = arith.mulf %0, %9 : vector<8x32xf32>
    %11 = arith.mulf %1, %1 : vector<8x32xf32>
    %cst_6 = arith.constant dense<0.000000e+00> : vector<8xf32>
    %12 = vector.multi_reduction <add>, %11, %cst_6 [1] : vector<8x32xf32> to vector<8xf32>
    %13 = vector.shape_cast %12 : vector<8xf32> to vector<8x1xf32>
    %cst_7 = arith.constant 1.000000e-24 : f32
    %14 = vector.broadcast %cst_7 : f32 to vector<8x1xf32>
    %15 = arith.maximumf %13, %14 : vector<8x1xf32>
    %16 = math.rsqrt %15 : vector<8x1xf32>
    %17 = vector.broadcast %16 : vector<8x1xf32> to vector<8x32xf32>
    %18 = arith.mulf %1, %17 : vector<8x32xf32>
    %19 = arith.mulf %10, %18 : vector<8x32xf32>
    %cst_8 = arith.constant dense<0.000000e+00> : vector<8xf32>
    %20 = vector.multi_reduction <add>, %19, %cst_8 [1] : vector<8x32xf32> to vector<8xf32>
    %21 = vector.shape_cast %20 : vector<8xf32> to vector<8x1xf32>
    %cst_9 = arith.constant -1.000000e+00 : f32
    %cst_10 = arith.constant 1.000000e+00 : f32
    %22 = vector.broadcast %cst_9 : f32 to vector<8x1xf32>
    %23 = arith.maximumf %22, %21 : vector<8x1xf32>
    %24 = vector.broadcast %cst_10 : f32 to vector<8x1xf32>
    %25 = arith.minimumf %24, %23 : vector<8x1xf32>
    %26 = math.absf %25 : vector<8x1xf32>
    %cst_11 = arith.constant -0.0012624911 : f32
    %27 = vector.broadcast %cst_11 : f32 to vector<8x1xf32>
    %28 = arith.mulf %27, %26 : vector<8x1xf32>
    %cst_12 = arith.constant 6.670090e-03 : f32
    %29 = vector.broadcast %cst_12 : f32 to vector<8x1xf32>
    %30 = arith.addf %28, %29 : vector<8x1xf32>
    %31 = arith.mulf %30, %26 : vector<8x1xf32>
    %cst_13 = arith.constant 0.0170881264 : f32
    %32 = vector.broadcast %cst_13 : f32 to vector<8x1xf32>
    %33 = arith.subf %31, %32 : vector<8x1xf32>
    %34 = arith.mulf %33, %26 : vector<8x1xf32>
    %cst_14 = arith.constant 0.0308918804 : f32
    %35 = vector.broadcast %cst_14 : f32 to vector<8x1xf32>
    %36 = arith.addf %34, %35 : vector<8x1xf32>
    %37 = arith.mulf %36, %26 : vector<8x1xf32>
    %cst_15 = arith.constant 0.0501743034 : f32
    %38 = vector.broadcast %cst_15 : f32 to vector<8x1xf32>
    %39 = arith.subf %37, %38 : vector<8x1xf32>
    %40 = arith.mulf %39, %26 : vector<8x1xf32>
    %cst_16 = arith.constant 0.0889789909 : f32
    %41 = vector.broadcast %cst_16 : f32 to vector<8x1xf32>
    %42 = arith.addf %40, %41 : vector<8x1xf32>
    %43 = arith.mulf %42, %26 : vector<8x1xf32>
    %cst_17 = arith.constant 0.214598805 : f32
    %44 = vector.broadcast %cst_17 : f32 to vector<8x1xf32>
    %45 = arith.subf %43, %44 : vector<8x1xf32>
    %46 = arith.mulf %45, %26 : vector<8x1xf32>
    %cst_18 = arith.constant 1.57079625 : f32
    %47 = vector.broadcast %cst_18 : f32 to vector<8x1xf32>
    %48 = arith.addf %46, %47 : vector<8x1xf32>
    %cst_19 = arith.constant 1.000000e+00 : f32
    %49 = vector.broadcast %cst_19 : f32 to vector<8x1xf32>
    %50 = arith.subf %49, %26 : vector<8x1xf32>
    %cst_20 = arith.constant 0.000000e+00 : f32
    %51 = vector.broadcast %cst_20 : f32 to vector<8x1xf32>
    %52 = arith.maximumf %50, %51 : vector<8x1xf32>
    %53 = math.sqrt %52 : vector<8x1xf32>
    %54 = arith.mulf %53, %48 : vector<8x1xf32>
    %cst_21 = arith.constant 0.000000e+00 : f32
    %55 = vector.broadcast %cst_21 : f32 to vector<8x1xf32>
    %56 = arith.cmpf olt, %25, %55 : vector<8x1xf32>
    %cst_22 = arith.constant 3.14159274 : f32
    %57 = vector.broadcast %cst_22 : f32 to vector<8x1xf32>
    %58 = arith.subf %57, %54 : vector<8x1xf32>
    %59 = arith.select %56, %58, %54 : vector<8x1xi1>, vector<8x1xf32>
    %60 = arith.mulf %25, %25 : vector<8x1xf32>
    %cst_23 = arith.constant 1.000000e+00 : f32
    %61 = vector.broadcast %cst_23 : f32 to vector<8x1xf32>
    %62 = arith.subf %61, %60 : vector<8x1xf32>
    %cst_24 = arith.constant 1.000000e-30 : f32
    %63 = vector.broadcast %cst_24 : f32 to vector<8x1xf32>
    %64 = arith.maximumf %62, %63 : vector<8x1xf32>
    %65 = math.rsqrt %64 : vector<8x1xf32>
    %cst_25 = arith.constant 1.000000e+00 : f32
    %66 = vector.broadcast %cst_25 : f32 to vector<1x1xf32>
    %67 = arith.subf %66, %2 : vector<1x1xf32>
    %68 = vector.broadcast %67 : vector<1x1xf32> to vector<8x1xf32>
    %69 = arith.mulf %68, %59 : vector<8x1xf32>
    %cst_26 = arith.constant 3.14159274 : f32
    %70 = vector.broadcast %cst_26 : f32 to vector<8x1xf32>
    %71 = arith.subf %70, %69 : vector<8x1xf32>
    %72 = arith.minimumf %69, %71 : vector<8x1xf32>
    %73 = arith.mulf %72, %72 : vector<8x1xf32>
    %cst_27 = arith.constant -2.50521079E-8 : f32
    %74 = vector.broadcast %cst_27 : f32 to vector<8x1xf32>
    %75 = arith.mulf %74, %73 : vector<8x1xf32>
    %cst_28 = arith.constant 2.75573188E-6 : f32
    %76 = vector.broadcast %cst_28 : f32 to vector<8x1xf32>
    %77 = arith.addf %75, %76 : vector<8x1xf32>
    %78 = arith.mulf %77, %73 : vector<8x1xf32>
    %cst_29 = arith.constant 1.98412701E-4 : f32
    %79 = vector.broadcast %cst_29 : f32 to vector<8x1xf32>
    %80 = arith.subf %78, %79 : vector<8x1xf32>
    %81 = arith.mulf %80, %73 : vector<8x1xf32>
    %cst_30 = arith.constant 0.00833333284 : f32
    %82 = vector.broadcast %cst_30 : f32 to vector<8x1xf32>
    %83 = arith.addf %81, %82 : vector<8x1xf32>
    %84 = arith.mulf %83, %73 : vector<8x1xf32>
    %cst_31 = arith.constant 0.166666672 : f32
    %85 = vector.broadcast %cst_31 : f32 to vector<8x1xf32>
    %86 = arith.subf %84, %85 : vector<8x1xf32>
    %87 = arith.mulf %73, %86 : vector<8x1xf32>
    %cst_32 = arith.constant 1.000000e+00 : f32
    %88 = vector.broadcast %cst_32 : f32 to vector<8x1xf32>
    %89 = arith.addf %88, %87 : vector<8x1xf32>
    %90 = arith.mulf %72, %89 : vector<8x1xf32>
    %91 = vector.broadcast %2 : vector<1x1xf32> to vector<8x1xf32>
    %92 = arith.mulf %91, %59 : vector<8x1xf32>
    %cst_33 = arith.constant 3.14159274 : f32
    %93 = vector.broadcast %cst_33 : f32 to vector<8x1xf32>
    %94 = arith.subf %93, %92 : vector<8x1xf32>
    %95 = arith.minimumf %92, %94 : vector<8x1xf32>
    %96 = arith.mulf %95, %95 : vector<8x1xf32>
    %cst_34 = arith.constant -2.50521079E-8 : f32
    %97 = vector.broadcast %cst_34 : f32 to vector<8x1xf32>
    %98 = arith.mulf %97, %96 : vector<8x1xf32>
    %cst_35 = arith.constant 2.75573188E-6 : f32
    %99 = vector.broadcast %cst_35 : f32 to vector<8x1xf32>
    %100 = arith.addf %98, %99 : vector<8x1xf32>
    %101 = arith.mulf %100, %96 : vector<8x1xf32>
    %cst_36 = arith.constant 1.98412701E-4 : f32
    %102 = vector.broadcast %cst_36 : f32 to vector<8x1xf32>
    %103 = arith.subf %101, %102 : vector<8x1xf32>
    %104 = arith.mulf %103, %96 : vector<8x1xf32>
    %cst_37 = arith.constant 0.00833333284 : f32
    %105 = vector.broadcast %cst_37 : f32 to vector<8x1xf32>
    %106 = arith.addf %104, %105 : vector<8x1xf32>
    %107 = arith.mulf %106, %96 : vector<8x1xf32>
    %cst_38 = arith.constant 0.166666672 : f32
    %108 = vector.broadcast %cst_38 : f32 to vector<8x1xf32>
    %109 = arith.subf %107, %108 : vector<8x1xf32>
    %110 = arith.mulf %96, %109 : vector<8x1xf32>
    %cst_39 = arith.constant 1.000000e+00 : f32
    %111 = vector.broadcast %cst_39 : f32 to vector<8x1xf32>
    %112 = arith.addf %111, %110 : vector<8x1xf32>
    %113 = arith.mulf %95, %112 : vector<8x1xf32>
    %114 = vector.broadcast %90 : vector<8x1xf32> to vector<8x32xf32>
    %115 = arith.mulf %114, %10 : vector<8x32xf32>
    %116 = vector.broadcast %113 : vector<8x1xf32> to vector<8x32xf32>
    %117 = arith.mulf %116, %18 : vector<8x32xf32>
    %118 = arith.addf %115, %117 : vector<8x32xf32>
    %119 = vector.broadcast %65 : vector<8x1xf32> to vector<8x32xf32>
    %120 = arith.mulf %118, %119 : vector<8x32xf32>
    %c0_40 = arith.constant 0 : index
    %c0_41 = arith.constant 0 : index
    %121 = vector.load %arg4[%c0_40, %c0_41] : memref<8x32xf32, #tpu.memory_space<vmem>>, vector<8x32xf32>
    tpu.vector_store %arg4[%c0_40, %c0_41], %120 {strides = array<i32>} : memref<8x32xf32, #tpu.memory_space<vmem>>, vector<8x32xf32>,
    return
  }
  func.func @transform_0(%arg0: i32) -> (i32, i32) {
    %c0_i32 = arith.constant 0 : i32
    %c0_i32_0 = arith.constant 0 : i32
    %c0_i32_1 = arith.constant 0 : i32
    return %c0_i32, %c0_i32_0 : i32, i32
  }
  func.func @transform_1(%arg0: i32) -> (i32, i32) {
    %c0_i32 = arith.constant 0 : i32
    %c0_i32_0 = arith.constant 0 : i32
    return %arg0, %c0_i32 : i32, i32
  }
  func.func @transform_2(%arg0: i32) -> (i32, i32) {
    %c0_i32 = arith.constant 0 : i32
    %c0_i32_0 = arith.constant 0 : i32
    return %arg0, %c0_i32 : i32, i32
  }
  func.func @transform_3(%arg0: i32) -> (i32, i32) {
    %c0_i32 = arith.constant 0 : i32
    %c0_i32_0 = arith.constant 0 : i32
    return %arg0, %c0_i32 : i32, i32
  }
}

</mosaic_0001>

<llo_original>
// kernel: tpu_custom_call.1
$region0: #{tpu_custom_call.1}
  #allocation0 [shape = 'u32[]', space=smem, size = 0x4, offset = 0x4, fixed_abs, tag = 'smem constant byte address 0x4 - core index']
  #allocation1 [shape = 'u32[72,128]{1,0:T(1,128)}', space=vmem, size = 0x9000, scoped, tag = 'internal scratch']
  #allocation2 [shape = 'f32[1,1]{1,0:T(1,128)S(1)}', space=vmem, size = 0x200, scoped, tag = 'scoped memory for tpu_custom_call.1']
  %s0 = inlined_call_operand.<no memory space> [shape: f32[1,1], index: 0, kind: input, shape index: {}]
  %s1 = inlined_call_operand.hbm [shape: f32[16,32], index: 1, kind: input, shape index: {}]
  %s2 = inlined_call_operand.hbm [shape: f32[16,32], index: 2, kind: input, shape index: {}]
  %s3 = inlined_call_operand.hbm [shape: f32[16,32], index: 3, kind: output, shape index: {}]
  %s4 = sld [smem:[#allocation0]]
  $region53: #{tpu_custom_call.1} parent=0
    _
  %s6 = ssub.s32 1, %s4
  %s7 = scalar_select 0, %s6, %s4
  %v8 = vstv %s0
  %9 = vst [vmem:[#allocation2] sm:$0x1] %v8
  $region1: #{tpu_custom_call.1} parent=0
    #allocation3 [shape = 'u8[8192]{0}', space=vmem, size = 0x2000, scoped, tag = 'input window, operand 1']
    #allocation4 [shape = 's32[2]{0}', space=sflag, size = 0x8, scoped, tag = 'scoped memory for tpu_custom_call.1']
    #allocation5 [shape = 's32[2]{0}', space=sflag, size = 0x8, scoped, tag = 'scoped memory for tpu_custom_call.1']
    #allocation6 [shape = 'u8[8192]{0}', space=vmem, size = 0x2000, scoped, tag = 'input window, operand 2']
    #allocation7 [shape = 's32[2]{0}', space=sflag, size = 0x8, scoped, tag = 'scoped memory for tpu_custom_call.1']
    #allocation8 [shape = 'u8[8192]{0}', space=vmem, size = 0x2000, scoped, tag = 'output window, operand 0']
    %10 = vsyncpa [#allocation4], 0
    %s11 = scalar_lea.sflag [#allocation4], 1
    %12 = vsyncpa %s11, 0
    %13 = vsyncpa [#allocation7], 0
    %s14 = scalar_lea.sflag [#allocation7], 1
    %15 = vsyncpa %s14, 0
    %16 = vsyncpa [#allocation5], 0
    %s17 = scalar_lea.sflag [#allocation5], 1
    %18 = vsyncpa %s17, 0
    loop: start=0, step=1, limit=4
    $region2: #{tpu_custom_call.1} parent=1 // loop_pre_header
      _
    $region3: #{tpu_custom_call.1} parent=1 // loop_header
      %s20 = sphi 0, %s24
      %p21 = scmp.ge.s32.totalorder %s20, 4
      %s28 = sphi 0, %s28
      %s30 = sphi 0, %s28
      %s31 = sphi 0, %s30
      %s45 = sphi 0, %s31
      %s51 = sphi 0, %s53
      %s54 = sphi 0, %s51
      %s55 = sphi 0, %s54
      %s71 = sphi 0, %s55
      %s77 = sphi 0, %s79
      %s80 = sphi 0, %s77
      %s81 = sphi 0, %s80
      %s97 = sphi 0, %s81
      %s103 = sphi 0, %s105
      %s106 = sphi 0, %s103
      %s107 = sphi 0, %s106
      %s123 = sphi 0, %s107
    $region4: #{tpu_custom_call.1} parent=1 // loop_header_branch
      %23 = sbr.rel (%p21) target = $region8
    $region5: #{tpu_custom_call.1} parent=1 // loop_body
      %s25 = ssub.s32 %s20, 1
      %s26 = ssub.s32 %s20, 2
      %s27 = sadd.s32 %s20, 1
      %s29 = sadd.s32 %s28, 1
      %p32 = scmp.eq.s32.totalorder %s20, 1
      %p33 = scmp.ne.s32.totalorder %s28, %s30
      %p34 = scmp.eq.s32.totalorder %s20, 0
      %p35 = por %p33, %p34
      %p36 = scmp.ne.s32.totalorder %s28, %s30
      %p37 = scmp.eq.s32.totalorder %s25, 1
      %p38 = por %p36, %p37
      %p39 = scmp.ne.s32.totalorder %s30, %s31
      %p40 = scmp.eq.s32.totalorder %s25, 0
      %p41 = por %p39, %p40
      %p42 = scmp.ne.s32.totalorder %s30, %s31
      %p43 = scmp.eq.s32.totalorder %s26, 1
      %p44 = por %p42, %p43
      %p46 = scmp.ne.s32.totalorder %s31, %s45
      %p47 = scmp.eq.s32.totalorder %s26, 0
      %p48 = por %p46, %p47
      %s49 = ssub.s32 %s20, %s27
      %p50 = scmp.eq.s32.totalorder %s49, 0
      %s52 = sadd.s32 %s51, 1
      %s53 = scalar_select %p50, %s51, %s52
      %p56 = pneg %p50
      %p57 = scmp.eq.s32.totalorder %s20, 1
      %p58 = por %p56, %p57
      %p59 = scmp.ne.s32.totalorder %s51, %s54
      %p60 = scmp.eq.s32.totalorder %s20, 0
      %p61 = por %p59, %p60
      %p62 = scmp.ne.s32.totalorder %s51, %s54
      %p63 = scmp.eq.s32.totalorder %s25, 1
      %p64 = por %p62, %p63
      %p65 = scmp.ne.s32.totalorder %s54, %s55
      %p66 = scmp.eq.s32.totalorder %s25, 0
      %p67 = por %p65, %p66
      %p68 = scmp.ne.s32.totalorder %s54, %s55
      %p69 = scmp.eq.s32.totalorder %s26, 1
      %p70 = por %p68, %p69
      %p72 = scmp.ne.s32.totalorder %s55, %s71
      %p73 = scmp.eq.s32.totalorder %s26, 0
      %p74 = por %p72, %p73
      %s75 = ssub.s32 %s20, %s27
      %p76 = scmp.eq.s32.totalorder %s75, 0
      %s78 = sadd.s32 %s77, 1
      %s79 = scalar_select %p76, %s77, %s78
      %p82 = pneg %p76
      %p83 = scmp.eq.s32.totalorder %s20, 1
      %p84 = por %p82, %p83
      %p85 = scmp.ne.s32.totalorder %s77, %s80
      %p86 = scmp.eq.s32.totalorder %s20, 0
      %p87 = por %p85, %p86
      %p88 = scmp.ne.s32.totalorder %s77, %s80
      %p89 = scmp.eq.s32.totalorder %s25, 1
      %p90 = por %p88, %p89
      %p91 = scmp.ne.s32.totalorder %s80, %s81
      %p92 = scmp.eq.s32.totalorder %s25, 0
      %p93 = por %p91, %p92
      %p94 = scmp.ne.s32.totalorder %s80, %s81
      %p95 = scmp.eq.s32.totalorder %s26, 1
      %p96 = por %p94, %p95
      %p98 = scmp.ne.s32.totalorder %s81, %s97
      %p99 = scmp.eq.s32.totalorder %s26, 0
      %p100 = por %p98, %p99
      %s101 = ssub.s32 %s20, %s27
      %p102 = scmp.eq.s32.totalorder %s101, 0
      %s104 = sadd.s32 %s103, 1
      %s105 = scalar_select %p102, %s103, %s104
      %p108 = pneg %p102
      %p109 = scmp.eq.s32.totalorder %s20, 1
      %p110 = por %p108, %p109
      %p111 = scmp.ne.s32.totalorder %s103, %s106
      %p112 = scmp.eq.s32.totalorder %s20, 0
      %p113 = por %p111, %p112
      %p114 = scmp.ne.s32.totalorder %s103, %s106
      %p115 = scmp.eq.s32.totalorder %s25, 1
      %p116 = por %p114, %p115
      %p117 = scmp.ne.s32.totalorder %s106, %s107
      %p118 = scmp.eq.s32.totalorder %s25, 0
      %p119 = por %p117, %p118
      %p120 = scmp.ne.s32.totalorder %s106, %s107
      %p121 = scmp.eq.s32.totalorder %s26, 1
      %p122 = por %p120, %p121
      %p124 = scmp.ne.s32.totalorder %s107, %s123
      %p125 = scmp.eq.s32.totalorder %s26, 0
      %p126 = por %p124, %p125
      %p127 = scmp.le.s32.totalorder 1, %s20
      %p128 = scmp.lt.s32.totalorder %s20, 3
      %p129 = pnand %p127, %p128
      %p130 = pneg %p129
      // Predicated region
      $region9: #{tpu_custom_call.1} parent=5 // pred_check
        _
      $region10: #{tpu_custom_call.1} parent=5 // pred_check_branch
        %132 = sbr.rel (%p129) target = $region12
      $region11: #{tpu_custom_call.1} parent=5 // pred_region
        %s133 = ssub.s32 %s20, 1
        // Predicated region
        $region13: #{tpu_custom_call.1} parent=11 // pred_check
          %p134 = pneg %p41
        $region14: #{tpu_custom_call.1} parent=11 // pred_check_branch
          %136 = sbr.rel (%p134) target = $region16
        $region15: #{tpu_custom_call.1} parent=11 // pred_region
          _
        $region16: #{tpu_custom_call.1} parent=11 // pred_fallthru
          _
      $region12: #{tpu_custom_call.1} parent=5 // pred_fallthru
        _
      %p137 = scmp.lt.s32.totalorder %s20, 2
      // Predicated region
      $region17: #{tpu_custom_call.1} parent=5 // pred_check
        %p138 = pneg %p137
      $region18: #{tpu_custom_call.1} parent=5 // pred_check_branch
        %140 = sbr.rel (%p138) target = $region20
      $region19: #{tpu_custom_call.1} parent=5 // pred_region
        // Predicated region
        $region21: #{tpu_custom_call.1} parent=19 // pred_check
          %p141 = pneg %p61
        $region22: #{tpu_custom_call.1} parent=19 // pred_check_branch
          %143 = sbr.rel (%p141) target = $region24
        $region23: #{tpu_custom_call.1} parent=19 // pred_region
          %s144 = sand.u32 %s51, 1
          %s145 = scalar_lea.sflag [#allocation4], %s144
          %s146 = sand.u32 %s51, 1
          %s147 = smul.addr %s146, 8
          %s148 = scalar_lea.vmem [#allocation3], %s147
          %150 = vsyncadd %s145, 0
          %s151 = smul.addr %s20, 8
          %s152 = scalar_lea.hbm %s1, %s151
          %s154 = sshll.u32 %s152, 4
          %s155 = int_to_ptr.hbm [resolvable:$true] %s154
          %s156 = sshll.u32 %s148, 4
          %s157 = int_to_ptr.vmem [resolvable:$true] %s156
          %159 = dma.hbm_to_vmem [thread:$0]  %s155, 128, %s157, %s145
        $region24: #{tpu_custom_call.1} parent=19 // pred_fallthru
          _
        // Predicated region
        $region25: #{tpu_custom_call.1} parent=19 // pred_check
          %p160 = pneg %p87
        $region26: #{tpu_custom_call.1} parent=19 // pred_check_branch
          %162 = sbr.rel (%p160) target = $region28
        $region27: #{tpu_custom_call.1} parent=19 // pred_region
          %s163 = sand.u32 %s77, 1
          %s164 = scalar_lea.sflag [#allocation7], %s163
          %s165 = sand.u32 %s77, 1
          %s166 = smul.addr %s165, 8
          %s167 = scalar_lea.vmem [#allocation6], %s166
          %169 = vsyncadd %s164, 0
          %s170 = smul.addr %s20, 8
          %s171 = scalar_lea.hbm %s2, %s170
          %s173 = sshll.u32 %s171, 4
          %s174 = int_to_ptr.hbm [resolvable:$true] %s173
          %s175 = sshll.u32 %s167, 4
          %s176 = int_to_ptr.vmem [resolvable:$true] %s175
          %178 = dma.hbm_to_vmem [thread:$0]  %s174, 128, %s176, %s164
        $region28: #{tpu_custom_call.1} parent=19 // pred_fallthru
          _
      $region20: #{tpu_custom_call.1} parent=5 // pred_fallthru
        _
      %p179 = scmp.le.s32.totalorder 1, %s20
      %p180 = scmp.lt.s32.totalorder %s20, 3
      %p181 = pnand %p179, %p180
      %p182 = pneg %p181
      // Predicated region
      $region29: #{tpu_custom_call.1} parent=5 // pred_check
        _
      $region30: #{tpu_custom_call.1} parent=5 // pred_check_branch
        %184 = sbr.rel (%p181) target = $region32
      $region31: #{tpu_custom_call.1} parent=5 // pred_region
        %s185 = ssub.s32 %s20, 1
        %s186 = sand.u32 %s54, 1
        %s187 = scalar_lea.sflag [#allocation4], %s186
        %s188 = sand.u32 %s54, 1
        %s189 = smul.addr %s188, 8
        %s190 = scalar_lea.vmem [#allocation3], %s189
        // Predicated region
        $region33: #{tpu_custom_call.1} parent=31 // pred_check
          %p191 = pneg %p67
        $region34: #{tpu_custom_call.1} parent=31 // pred_check_branch
          %193 = sbr.rel (%p191) target = $region36
        $region35: #{tpu_custom_call.1} parent=31 // pred_region
          %195 = dma.done %s187, 128
        $region36: #{tpu_custom_call.1} parent=31 // pred_fallthru
          _
        %s196 = sand.u32 %s80, 1
        %s197 = scalar_lea.sflag [#allocation7], %s196
        %s198 = sand.u32 %s80, 1
        %s199 = smul.addr %s198, 8
        %s200 = scalar_lea.vmem [#allocation6], %s199
        // Predicated region
        $region37: #{tpu_custom_call.1} parent=31 // pred_check
          %p201 = pneg %p93
        $region38: #{tpu_custom_call.1} parent=31 // pred_check_branch
          %203 = sbr.rel (%p201) target = $region40
        $region39: #{tpu_custom_call.1} parent=31 // pred_region
          %205 = dma.done %s197, 128
        $region40: #{tpu_custom_call.1} parent=31 // pred_fallthru
          _
        %p206 = pneg %p41
        %p207 = pneg %p38
        %s208 = sand.u32 %s54, 1
        %s209 = scalar_lea.sflag [#allocation4], %s208
        %s210 = sand.u32 %s54, 1
        %s211 = smul.addr %s210, 8
        %s212 = scalar_lea.vmem [#allocation3], %s211
        %p213 = pneg %p67
        %p214 = pneg %p64
        %s215 = sand.u32 %s80, 1
        %s216 = scalar_lea.sflag [#allocation7], %s215
        %s217 = sand.u32 %s80, 1
        %s218 = smul.addr %s217, 8
        %s219 = scalar_lea.vmem [#allocation6], %s218
        %p220 = pneg %p93
        %p221 = pneg %p90
        %p222 = pneg %p119
        %p223 = pneg %p116
        %s224 = sand.u32 %s106, 1
        %s225 = scalar_lea.sflag [#allocation5], %s224
        %s226 = sand.u32 %s106, 1
        %s227 = smul.addr %s226, 8
        %s228 = scalar_lea.vmem [#allocation8], %s227
        %v229 = vld [vmem:[%s190] sm:$0xff]
        %v230 = vld [vmem:[%s200] sm:$0xff]
        %v231 = vld [vmem:[#allocation2] sm:$0x1]
        %v232 = vmul.f32 %v229, %v229
        %vm233 = vcmask 261120
        %v234 = vsel %vm233, %v232, 0.0
        %235 = vadd.xlane.f32.xlu0 %v234
        %v236 = vpop.xlane.xlu0 %235
        %v237 = vmax.f32 %v236, 1e-24
        %v238 = vrsqrt.pop %v237
        %v239 = vmul.f32 %v238, %v237
        %v240 = vmul.f32 %v239, %v238
        %v241 = vmul.f32 0.5, %v240
        %v242 = vsub.f32 1.5, %v241
        %v243 = vmul.f32 %v238, %v242
        %vm244 = vweird.f32 %v237
        %vm245 = vweird.f32 %v238
        %vm246 = vmor %vm244, %vm245
        %v247 = vsel %vm246, %v238, %v243
        %v248 = vmul.f32 %v229, %v247
        %v249 = vmul.f32 %v230, %v230
        %v250 = vsel %vm233, %v249, 0.0
        %251 = vadd.xlane.f32.xlu0 %v250
        %v252 = vpop.xlane.xlu0 %251
        %v253 = vmax.f32 %v252, 1e-24
        %v254 = vrsqrt.pop %v253
        %v255 = vmul.f32 %v254, %v253
        %v256 = vmul.f32 %v255, %v254
        %v257 = vmul.f32 0.5, %v256
        %v258 = vsub.f32 1.5, %v257
        %v259 = vmul.f32 %v254, %v258
        %vm260 = vweird.f32 %v253
        %vm261 = vweird.f32 %v254
        %vm262 = vmor %vm260, %vm261
        %v263 = vsel %vm262, %v254, %v259
        %v264 = vmul.f32 %v230, %v263
        %v265 = vmul.f32 %v248, %v264
        %v266 = vsel %vm233, %v265, 0.0
        %267 = vadd.xlane.f32.xlu0 %v266
        %v268 = vpop.xlane.xlu0 %267
        %v269 = vmax.f32 %v268, -1.0
        %v270 = vmin.f32 %v269, 1.0
        %v271 = vand.u32 2147483647, %v270
        %v272 = vmul.f32 %v271, -0.0012624911
        %v273 = vadd.f32 %v272, 0.00667009
        %v274 = vmul.f32 %v273, %v271
        %v275 = vsub.f32 %v274, 0.017088126
        %v276 = vmul.f32 %v275, %v271
        %v277 = vadd.f32 %v276, 0.03089188
        %v278 = vmul.f32 %v277, %v271
        %v279 = vsub.f32 %v278, 0.050174303
        %v280 = vmul.f32 %v279, %v271
        %v281 = vadd.f32 %v280, 0.08897899
        %v282 = vmul.f32 %v281, %v271
        %v283 = vsub.f32 %v282, 0.2145988
        %v284 = vmul.f32 %v283, %v271
        %v285 = vadd.f32 %v284, 1.5707963
        %v286 = vsub.f32 1.0, %v271
        %v287 = vmax.f32 %v286, 0.0
        %v288 = vrsqrt.pop %v287
        %v289 = vmul.f32 %v288, %v287
        %v290 = vmul.f32 %v289, %v288
        %v291 = vmul.f32 0.5, %v290
        %v292 = vsub.f32 1.5, %v291
        %v293 = vmul.f32 %v288, %v292
        %v294 = vmul.f32 %v287, %v293
        %vm295 = vcmp.eq.f32.partialorder %v287, inf
        %v296 = vsel %vm295, %v287, %v294
        %vm297 = vcmp.eq.f32.partialorder %v287, 0.0
        %v298 = vand.u32 %v287, 2147483648
        %v299 = vsel %vm297, %v298, %v296
        %v300 = vmul.f32 %v299, %v285
        %vm301 = vcmp.lt.f32.partialorder %v270, 0.0
        %v302 = vsub.f32 3.1415927, %v300
        %v303 = vsel %vm301, %v302, %v300
        %v304 = vmul.f32 %v270, %v270
        %v305 = vsub.f32 1.0, %v304
        %v306 = vmax.f32 %v305, 1e-30
        %v307 = vrsqrt.pop %v306
        %v308 = vmul.f32 %v307, %v306
        %v309 = vmul.f32 %v308, %v307
        %v310 = vmul.f32 0.5, %v309
        %v311 = vsub.f32 1.5, %v310
        %v312 = vmul.f32 %v307, %v311
        %vm313 = vweird.f32 %v306
        %vm314 = vweird.f32 %v307
        %vm315 = vmor %vm313, %vm314
        %v316 = vsel %vm315, %v307, %v312
        %v317 = vsub.f32 1.0, %v231
        %v319 = vperm.slane %v317, 0
        %v321 = vmul.f32 %v319, %v303
        %v322 = vsub.f32 3.1415927, %v321
        %v323 = vmin.f32 %v321, %v322
        %v324 = vmul.f32 %v323, %v323
        %v325 = vmul.f32 %v324, -2.5052108e-08
        %v326 = vadd.f32 %v325, 2.7557319e-06
        %v327 = vmul.f32 %v326, %v324
        %v328 = vsub.f32 %v327, 0.0001984127
        %v329 = vmul.f32 %v328, %v324
        %v330 = vadd.f32 %v329, 0.008333333
        %v331 = vmul.f32 %v330, %v324
        %v332 = vsub.f32 %v331, 0.16666667
        %v333 = vmul.f32 %v324, %v332
        %v334 = vadd.f32 %v333, 1.0
        %v335 = vmul.f32 %v323, %v334
        %v337 = vperm.slane %v231, 0
        %v339 = vmul.f32 %v337, %v303
        %v340 = vsub.f32 3.1415927, %v339
        %v341 = vmin.f32 %v339, %v340
        %v342 = vmul.f32 %v341, %v341
        %v343 = vmul.f32 %v342, -2.5052108e-08
        %v344 = vadd.f32 %v343, 2.7557319e-06
        %v345 = vmul.f32 %v344, %v342
        %v346 = vsub.f32 %v345, 0.0001984127
        %v347 = vmul.f32 %v346, %v342
        %v348 = vadd.f32 %v347, 0.008333333
        %v349 = vmul.f32 %v348, %v342
        %v350 = vsub.f32 %v349, 0.16666667
        %v351 = vmul.f32 %v342, %v350
        %v352 = vadd.f32 %v351, 1.0
        %v353 = vmul.f32 %v341, %v352
        %355 = vset.pattern.permute.xlu0 0
        %356 = vperm.xlu0 %355, %v335
        %v357 = vpop.permute.xlu0 %356
        %v359 = vmul.f32 %v357, %v248
        %361 = vset.pattern.permute.xlu0 0
        %362 = vperm.xlu0 %361, %v353
        %v363 = vpop.permute.xlu0 %362
        %v365 = vmul.f32 %v363, %v264
        %v366 = vadd.f32 %v359, %v365
        %v367 = vmul.f32 %v366, %v316
        %368 = vst.msk [vmem:[%s228] sm:$0xff] %vm233, %v367
        %s369 = sand.u32 %s106, 1
        %s370 = scalar_lea.sflag [#allocation5], %s369
        %s371 = sand.u32 %s106, 1
        %s372 = smul.addr %s371, 8
        %s373 = scalar_lea.vmem [#allocation8], %s372
        // Predicated region
        $region41: #{tpu_custom_call.1} parent=31 // pred_check
          %p374 = pneg %p116
        $region42: #{tpu_custom_call.1} parent=31 // pred_check_branch
          %376 = sbr.rel (%p374) target = $region44
        $region43: #{tpu_custom_call.1} parent=31 // pred_region
          %378 = vsyncadd %s370, 0
          %s379 = smul.addr %s25, 8
          %s380 = scalar_lea.hbm %s3, %s379
          %s382 = sshll.u32 %s373, 4
          %s383 = int_to_ptr.vmem [resolvable:$true] %s382
          %s384 = sshll.u32 %s380, 4
          %s385 = int_to_ptr.hbm [resolvable:$true] %s384
          %387 = dma.vmem_to_hbm [thread:$0]  %s383, 128, %s385, %s370
        $region44: #{tpu_custom_call.1} parent=31 // pred_fallthru
          _
      $region32: #{tpu_custom_call.1} parent=5 // pred_fallthru
        _
      %p388 = scmp.le.s32.totalorder 2, %s20
      // Predicated region
      $region45: #{tpu_custom_call.1} parent=5 // pred_check
        %p389 = pneg %p388
      $region46: #{tpu_custom_call.1} parent=5 // pred_check_branch
        %391 = sbr.rel (%p389) target = $region48
      $region47: #{tpu_custom_call.1} parent=5 // pred_region
        %s392 = ssub.s32 %s20, 2
        // Predicated region
        $region49: #{tpu_custom_call.1} parent=47 // pred_check
          %p393 = pneg %p122
        $region50: #{tpu_custom_call.1} parent=47 // pred_check_branch
          %395 = sbr.rel (%p393) target = $region52
        $region51: #{tpu_custom_call.1} parent=47 // pred_region
          %s396 = sand.u32 %s107, 1
          %s397 = scalar_lea.sflag [#allocation5], %s396
          %s398 = sand.u32 %s107, 1
          %s399 = smul.addr %s398, 8
          %s400 = scalar_lea.vmem [#allocation8], %s399
          %402 = dma.done %s397, 128
        $region52: #{tpu_custom_call.1} parent=47 // pred_fallthru
          _
      $region48: #{tpu_custom_call.1} parent=5 // pred_fallthru
        _
    $region6: #{tpu_custom_call.1} parent=1 // loop_footer
      %s24 = sadd.s32 1, %s20
    $region7: #{tpu_custom_call.1} parent=1 // loop_footer_branch
      %19 = sbr.rel target = $region3
    $region8: #{tpu_custom_call.1} parent=1 // loop_exit
      _
    %403 = vsyncpa [#allocation4], 1
    %s404 = scalar_lea.sflag [#allocation4], 1
    %405 = vsyncpa %s404, 1
    %406 = vsyncpa [#allocation7], 1
    %s407 = scalar_lea.sflag [#allocation7], 1
    %408 = vsyncpa %s407, 1
    %409 = vsyncpa [#allocation5], 1
    %s410 = scalar_lea.sflag [#allocation5], 1
    %411 = vsyncpa %s410, 1

</llo_original>
